<compile_context>
chip_gen: v6e
topology: v6e:2x2x1
jax: 0.10.0
libtpu: 0.0.40
codegen_flags: <defaults>
</compile_context>

<pallas_src>
import functools

import jax
import jax.numpy as jnp
from jax.experimental import pallas as pl
from jax.experimental.pallas import tpu as pltpu


HIDDEN = 64          # fixed by the module: nn.Linear(in_features, 64)


def _round_up(x, m):
    return (x + m - 1) // m * m


def mlp_kernel(x_ref, w1t_ref, b1_ref, w2t_ref, b2_ref, o_ref):
    # x:   [TB, F]   (batch tile, streamed; stays f32 in HBM)
    # w1t: [F, H]    b1: [1, H]   (resident across the grid)
    # w2t: [H, A]    b2: [1, A]   (resident, unpadded)
    # o:   [TB, A]   (unpadded — last dim equals the full array dim)
    x = x_ref[...].astype(w1t_ref.dtype)          # in-kernel cast to MXU dtype
    # Layer 1 (MXU, f32 accumulate) + bias + tanh in f32 (EUP path).
    h = jnp.dot(x, w1t_ref[...], preferred_element_type=jnp.float32) + b1_ref[...]
    h = jnp.tanh(h)
    # Layer 2: feed the MXU in the weights' dtype, accumulate f32.
    q = jnp.dot(h.astype(w2t_ref.dtype), w2t_ref[...],
                preferred_element_type=jnp.float32) + b2_ref[...]
    o_ref[...] = q.astype(o_ref.dtype)


def prepare_params(w1, b1, w2, b2, compute_dtype=jnp.bfloat16):
    """One-time conversion of PyTorch-layout params into kernel layout.

    w1: [H, F]  b1: [H]   w2: [A, H]  b2: [A]   (PyTorch nn.Linear layout)
    Returns (w1t [F,H], b1 [1,H] f32, w2t [H,A], b2 [1,A] f32).
    """
    H, F = w1.shape
    A = w2.shape[0]
    w1t = jnp.asarray(w1.T, dtype=compute_dtype)                  # [F, H]
    b1_2d = jnp.asarray(b1, dtype=jnp.float32).reshape(1, H)      # [1, H]
    w2t = jnp.asarray(w2.T, dtype=compute_dtype)                  # [H, A]
    b2_2d = jnp.asarray(b2, dtype=jnp.float32).reshape(1, A)      # [1, A]
    return w1t, b1_2d, w2t, b2_2d


@functools.partial(jax.jit, static_argnames=("tile_b",))
def network_forward(x, w1t, b1, w2t, b2, *, tile_b=1024):
    """Equivalent of Network.forward(x): [B, F] -> [B, n_actions] f32."""
    B, F = x.shape
    H = w1t.shape[1]
    A = w2t.shape[1]

    # Batch tile: <= tile_b, but split into >= 2 grid steps whenever B allows
    # so the "parallel" batch axis can shard across both v7x TensorCores.
    tb = min(tile_b, _round_up(pl.cdiv(B, 2), 8))
    grid = (pl.cdiv(B, tb),)

    cost = pl.CostEstimate(
        flops=2 * B * (F * H + H * A),
        transcendentals=B * H,
        bytes_accessed=B * F * x.dtype.itemsize + B * A * 4
        + (F * H + H * A) * w1t.dtype.itemsize + (H + A) * 4,
    )

    return pl.pallas_call(
        mlp_kernel,
        out_shape=jax.ShapeDtypeStruct((B, A), jnp.float32),
        grid_spec=pltpu.PrefetchScalarGridSpec(
            num_scalar_prefetch=0,
            grid=grid,
            in_specs=[
                pl.BlockSpec((tb, F), lambda i: (i, 0)),   # x: streamed per tile
                pl.BlockSpec((F, H), lambda i: (0, 0)),    # w1t: resident
                pl.BlockSpec((1, H), lambda i: (0, 0)),    # b1: resident
                pl.BlockSpec((H, A), lambda i: (0, 0)),    # w2t: resident
                pl.BlockSpec((1, A), lambda i: (0, 0)),    # b2: resident
            ],
            out_specs=pl.BlockSpec((tb, A), lambda i: (i, 0)),
        ),
        compiler_params=pltpu.CompilerParams(
            dimension_semantics=("parallel",),             # megacore on v7x
        ),
        cost_estimate=cost,
    )(x, w1t, b1, w2t, b2)


def init_params(key, in_features, hidden, n_actions):
    """Deterministic PyTorch-style (uniform +/- 1/sqrt(fan_in)) init."""
    k1, k2, k3, k4 = jax.random.split(key, 4)
    bound1 = 1.0 / jnp.sqrt(in_features)
    bound2 = 1.0 / jnp.sqrt(hidden)
    w1 = jax.random.uniform(k1, (hidden, in_features), jnp.float32, -bound1, bound1)
    b1 = jax.random.uniform(k2, (hidden,), jnp.float32, -bound1, bound1)
    w2 = jax.random.uniform(k3, (n_actions, hidden), jnp.float32, -bound2, bound2)
    b2 = jax.random.uniform(k4, (n_actions,), jnp.float32, -bound2, bound2)
    return w1, b1, w2, b2


if __name__ == "__main__":
    # Classic-control DQN shapes (e.g. CartPole): obs dim = 4, hidden = 64
    # (fixed by the module), n_actions = 2, batch = 2.
    B, F, H, A = 2, 4, HIDDEN, 2

    key = jax.random.PRNGKey(0)
    k_params, k_x = jax.random.split(key)
    w1, b1, w2, b2 = init_params(k_params, F, H, A)
    x = jax.random.normal(k_x, (B, F), dtype=jnp.float32)

    # Plain-JAX reference (same math as the PyTorch module).
    q_ref = jnp.tanh(x @ w1.T + b1) @ w2.T + b2

    # Exact f32 path — matches the reference to tight tolerance.
    p_f32 = prepare_params(w1, b1, w2, b2, compute_dtype=jnp.float32)
    q_f32 = jax.block_until_ready(network_forward(x, *p_f32))
    assert q_f32.shape == (B, A), q_f32.shape
    assert jnp.allclose(q_f32, q_ref, atol=1e-5, rtol=1e-5)

    # Default bf16-MXU path (f32 accumulation / bias / tanh) — bf16 tolerance.
    p_bf16 = prepare_params(w1, b1, w2, b2)          # compute_dtype=bfloat16
    q_bf16 = jax.block_until_ready(network_forward(x, *p_bf16))
    assert q_bf16.shape == (B, A), q_bf16.shape
    assert jnp.allclose(q_bf16, q_ref, atol=3e-2, rtol=3e-2)

    print("KERNEL_OK")
</pallas_src>

<mosaic_0001>
module attributes {stable_mosaic.version = 11 : i64} {
  func.func @mlp_kernel(%arg0: i32, %arg1: memref<8x4xf32, #tpu.memory_space<vmem>>, %arg2: memref<4x64xf32, #tpu.memory_space<vmem>>, %arg3: memref<1x64xf32, #tpu.memory_space<vmem>>, %arg4: memref<64x2xf32, #tpu.memory_space<vmem>>, %arg5: memref<1x2xf32, #tpu.memory_space<vmem>>, %arg6: memref<8x2xf32, #tpu.memory_space<vmem>>) attributes {dimension_semantics = [#tpu.dimension_semantics<parallel>], iteration_bounds = array<i64: 1>, scalar_prefetch = 0 : i64, scratch_operands = 0 : i64, tpu.core_type = #tpu.core_type<tc>, window_params = [{transform_indices = @transform_0, window_bounds = array<i64: 8, 4>}, {pipeline_mode = #tpu.pipeline_mode<synchronous>, transform_indices = @transform_1, window_bounds = array<i64: 4, 64>}, {pipeline_mode = #tpu.pipeline_mode<synchronous>, transform_indices = @transform_2, window_bounds = array<i64: 1, 64>}, {pipeline_mode = #tpu.pipeline_mode<synchronous>, transform_indices = @transform_3, window_bounds = array<i64: 64, 2>}, {pipeline_mode = #tpu.pipeline_mode<synchronous>, transform_indices = @transform_4, window_bounds = array<i64: 1, 2>}, {transform_indices = @transform_5, window_bounds = array<i64: 8, 2>}]} {
    %c0 = arith.constant 0 : index
    %c0_0 = arith.constant 0 : index
    %0 = vector.load %arg1[%c0, %c0_0] : memref<8x4xf32, #tpu.memory_space<vmem>>, vector<8x4xf32>
    %c0_1 = arith.constant 0 : index
    %c0_2 = arith.constant 0 : index
    %1 = vector.load %arg2[%c0_1, %c0_2] : memref<4x64xf32, #tpu.memory_space<vmem>>, vector<4x64xf32>
    %cst = arith.constant dense<0.000000e+00> : vector<8x64xf32>
    %2 = tpu.matmul %0, %1, %cst {dimension_numbers = #tpu.dot_dimension_numbers<[1], [0], [0], [1], [0, 0, 1, 1], [], []>} : vector<8x4xf32>, vector<4x64xf32>, vector<8x64xf32> -> vector<8x64xf32>
    %c0_3 = arith.constant 0 : index
    %c0_4 = arith.constant 0 : index
    %3 = vector.load %arg3[%c0_3, %c0_4] : memref<1x64xf32, #tpu.memory_space<vmem>>, vector<1x64xf32>
    %4 = vector.broadcast %3 : vector<1x64xf32> to vector<8x64xf32>
    %5 = arith.addf %2, %4 : vector<8x64xf32>
    %6 = math.tanh %5 : vector<8x64xf32>
    %c0_5 = arith.constant 0 : index
    %c0_6 = arith.constant 0 : index
    %7 = vector.load %arg4[%c0_5, %c0_6] : memref<64x2xf32, #tpu.memory_space<vmem>>, vector<64x2xf32>
    %cst_7 = arith.constant dense<0.000000e+00> : vector<8x2xf32>
    %8 = tpu.matmul %6, %7, %cst_7 {dimension_numbers = #tpu.dot_dimension_numbers<[1], [0], [0], [1], [0, 0, 1, 1], [], []>} : vector<8x64xf32>, vector<64x2xf32>, vector<8x2xf32> -> vector<8x2xf32>
    %c0_8 = arith.constant 0 : index
    %c0_9 = arith.constant 0 : index
    %9 = vector.load %arg5[%c0_8, %c0_9] : memref<1x2xf32, #tpu.memory_space<vmem>>, vector<1x2xf32>
    %10 = vector.broadcast %9 : vector<1x2xf32> to vector<8x2xf32>
    %11 = arith.addf %8, %10 : vector<8x2xf32>
    %c0_10 = arith.constant 0 : index
    %c0_11 = arith.constant 0 : index
    %12 = vector.load %arg6[%c0_10, %c0_11] : memref<8x2xf32, #tpu.memory_space<vmem>>, vector<8x2xf32>
    tpu.vector_store %arg6[%c0_10, %c0_11], %11 {strides = array<i32>} : memref<8x2xf32, #tpu.memory_space<vmem>>, vector<8x2xf32>,
    return
  }
  func.func @transform_0(%arg0: i32) -> (i32, i32) {
    %c0_i32 = arith.constant 0 : i32
    %c0_i32_0 = arith.constant 0 : i32
    return %arg0, %c0_i32 : i32, i32
  }
  func.func @transform_1(%arg0: i32) -> (i32, i32) {
    %c0_i32 = arith.constant 0 : i32
    %c0_i32_0 = arith.constant 0 : i32
    %c0_i32_1 = arith.constant 0 : i32
    return %c0_i32, %c0_i32_0 : i32, i32
  }
  func.func @transform_2(%arg0: i32) -> (i32, i32) {
    %c0_i32 = arith.constant 0 : i32
    %c0_i32_0 = arith.constant 0 : i32
    %c0_i32_1 = arith.constant 0 : i32
    return %c0_i32, %c0_i32_0 : i32, i32
  }
  func.func @transform_3(%arg0: i32) -> (i32, i32) {
    %c0_i32 = arith.constant 0 : i32
    %c0_i32_0 = arith.constant 0 : i32
    %c0_i32_1 = arith.constant 0 : i32
    return %c0_i32, %c0_i32_0 : i32, i32
  }
  func.func @transform_4(%arg0: i32) -> (i32, i32) {
    %c0_i32 = arith.constant 0 : i32
    %c0_i32_0 = arith.constant 0 : i32
    %c0_i32_1 = arith.constant 0 : i32
    return %c0_i32, %c0_i32_0 : i32, i32
  }
  func.func @transform_5(%arg0: i32) -> (i32, i32) {
    %c0_i32 = arith.constant 0 : i32
    %c0_i32_0 = arith.constant 0 : i32
    return %arg0, %c0_i32 : i32, i32
  }
}

</mosaic_0001>

<llo_original>
// kernel: network_forward.1
$region0: #{network_forward.1}
  #allocation0 [shape = 'u32[]', space=smem, size = 0x4, offset = 0x4, fixed_abs, tag = 'smem constant byte address 0x4 - core index']
  #allocation1 [shape = 'u32[144,128]{1,0:T(1,128)}', space=vmem, size = 0x12000, scoped, tag = 'internal scratch']
  %s0 = inlined_call_operand.vmem [shape: f32[2,4], index: 0, kind: input, shape index: {}]
  %s1 = inlined_call_operand.vmem [shape: f32[4,64], index: 1, kind: input, shape index: {}]
  %s2 = inlined_call_operand.vmem [shape: f32[1,64], index: 2, kind: input, shape index: {}]
  %s3 = inlined_call_operand.vmem [shape: f32[64,2], index: 3, kind: input, shape index: {}]
  %s4 = inlined_call_operand.vmem [shape: f32[1,2], index: 4, kind: input, shape index: {}]
  %s5 = inlined_call_operand.hbm [shape: f32[2,2], index: 5, kind: output, shape index: {}]
  %s6 = sld [smem:[#allocation0]]
  $region30: #{network_forward.1} parent=0
    _
  %s8 = ssub.s32 1, %s6
  %s9 = scalar_select 0, %s8, %s6
  $region1: #{network_forward.1} parent=0
    #allocation2 [shape = 'u8[4096]{0}', space=vmem, size = 0x1000, scoped, tag = 'output window, operand 0, single buffered']
    #allocation3 [shape = 's32[1]{0}', space=sflag, size = 0x4, scoped, tag = 'scoped memory for network_forward.1']
    %10 = vsyncpa [#allocation3], 0
    // Predicated region
    $region2: #{network_forward.1} parent=1 // pred_check
      _
    $region3: #{network_forward.1} parent=1 // pred_check_branch
      %12 = sbr.rel (0) target = $region5
    $region4: #{network_forward.1} parent=1 // pred_region
      _
    $region5: #{network_forward.1} parent=1 // pred_fallthru
      _
    // Predicated region
    $region6: #{network_forward.1} parent=1 // pred_check
      _
    $region7: #{network_forward.1} parent=1 // pred_check_branch
      %14 = sbr.rel (0) target = $region9
    $region8: #{network_forward.1} parent=1 // pred_region
      _
    $region9: #{network_forward.1} parent=1 // pred_fallthru
      _
    // Predicated region
    $region10: #{network_forward.1} parent=1 // pred_check
      _
    $region11: #{network_forward.1} parent=1 // pred_check_branch
      %16 = sbr.rel (0) target = $region13
    $region12: #{network_forward.1} parent=1 // pred_region
      _
    $region13: #{network_forward.1} parent=1 // pred_fallthru
      _
    // Predicated region
    $region14: #{network_forward.1} parent=1 // pred_check
      _
    $region15: #{network_forward.1} parent=1 // pred_check_branch
      %18 = sbr.rel (0) target = $region17
    $region16: #{network_forward.1} parent=1 // pred_region
      _
    $region17: #{network_forward.1} parent=1 // pred_fallthru
      _
    // Predicated region
    $region18: #{network_forward.1} parent=1 // pred_check
      _
    $region19: #{network_forward.1} parent=1 // pred_check_branch
      %20 = sbr.rel (0) target = $region21
    $region20: #{network_forward.1} parent=1 // pred_region
      _
    $region21: #{network_forward.1} parent=1 // pred_fallthru
      _
    %v21 = vld [vmem:[%s0] sm:$0xff]
    %v22 = vld [vmem:[%s1] sm:$0xf]
    %v23 = vld [vmem:[%s2] sm:$0x1]
    %v25 = vlaneseq
    %v26 = vshrl.u32 %v25, 7
    %v27 = vsub.s32 0, %v26
    %v28 = vrot.slane %v23, %v27
    %vm30 = vcmask 31744
    %v32 = vsel %vm30, %v21, 0
    %vm34 = vcmask 1043456
    %v36 = vsel %vm34, %v22, 0
    %38 = vmatprep.subr.mxu0 0.0
    %39 = vmatpush1.msra.mxu0 0.0
    %40 = vmatprep.subr.mxu0 0.0
    %41 = vmatpush1.msra.mxu0 0.0
    %42 = vmatprep.subr.mxu0 0.0
    %43 = vmatpush1.msra.mxu0 0.0
    %44 = vmatprep.subr.mxu0 0.0
    %45 = vmatpush1.msra.mxu0 0.0
    %46 = vmatprep.subr.mxu0 0.0
    %47 = vmatpush1.msra.mxu0 0.0
    %48 = vmatprep.subr.mxu0 0.0
    %49 = vmatpush1.msra.mxu0 0.0
    %50 = vmatprep.subr.mxu0 0.0
    %51 = vmatpush1.msra.mxu0 0.0
    %52 = vmatprep.subr.mxu0 0.0
    %53 = vmatpush1.msra.mxu0 0.0
    %54 = vmatprep.subr.mxu0 0.0
    %55 = vmatpush1.msra.mxu0 0.0
    %56 = vmatprep.subr.mxu0 0.0
    %57 = vmatpush1.msra.mxu0 0.0
    %58 = vmatprep.subr.mxu0 0.0
    %59 = vmatpush1.msra.mxu0 0.0
    %60 = vmatprep.subr.mxu0 0.0
    %61 = vmatpush1.msra.mxu0 0.0
    %62 = vmatprep.subr.mxu0 0.0
    %63 = vmatpush1.msra.mxu0 0.0
    %64 = vmatprep.subr.mxu0 0.0
    %65 = vmatpush1.msra.mxu0 0.0
    %66 = vmatprep.subr.mxu0 0.0
    %67 = vmatpush1.msra.mxu0 0.0
    %68 = vmatprep.subr.mxu0 0.0
    %69 = vmatpush1.msra.mxu0 %v36
    %70 = vmatprep.subr.mxu0 0.0
    %71 = vmatpush2.msra.mxu0 0.0
    %72 = vmatprep.subr.mxu0 0.0
    %73 = vmatpush2.msra.mxu0 0.0
    %74 = vmatprep.subr.mxu0 0.0
    %75 = vmatpush2.msra.mxu0 0.0
    %76 = vmatprep.subr.mxu0 0.0
    %77 = vmatpush2.msra.mxu0 0.0
    %78 = vmatprep.subr.mxu0 0.0
    %79 = vmatpush2.msra.mxu0 0.0
    %80 = vmatprep.subr.mxu0 0.0
    %81 = vmatpush2.msra.mxu0 0.0
    %82 = vmatprep.subr.mxu0 0.0
    %83 = vmatpush2.msra.mxu0 0.0
    %84 = vmatprep.subr.mxu0 0.0
    %85 = vmatpush2.msra.mxu0 0.0
    %86 = vmatprep.subr.mxu0 0.0
    %87 = vmatpush2.msra.mxu0 0.0
    %88 = vmatprep.subr.mxu0 0.0
    %89 = vmatpush2.msra.mxu0 0.0
    %90 = vmatprep.subr.mxu0 0.0
    %91 = vmatpush2.msra.mxu0 0.0
    %92 = vmatprep.subr.mxu0 0.0
    %93 = vmatpush2.msra.mxu0 0.0
    %94 = vmatprep.subr.mxu0 0.0
    %95 = vmatpush2.msra.mxu0 0.0
    %96 = vmatprep.subr.mxu0 0.0
    %97 = vmatpush2.msra.mxu0 0.0
    %98 = vmatprep.subr.mxu0 0.0
    %99 = vmatpush2.msra.mxu0 0.0
    %100 = vmatprep.subr.mxu0 0.0
    %101 = vmatpush2.msra.mxu0 0.0
    %102 = vmatprep.mubr.f32.mxu0 0.0
    %103 = vmatmul.mubr.f32.gmra.mxu0 %v32
    %v104 = vpop.f32.mrf.mxu0
    %v105 = vadd.f32 %v28, %v104
    %v106 = vpop.f32.mrf.mxu0
    %107 = vdwg.mxu0
    %v108 = vtanh.pop %v105
    %v109 = vld [vmem:[%s3] sm:$0xff]
    %v110 = vld [vmem:[%s3 + $0x8] sm:$0xff]
    %v111 = vld [vmem:[%s3 + $0x10] sm:$0xff]
    %v112 = vld [vmem:[%s3 + $0x18] sm:$0xff]
    %v113 = vld [vmem:[%s3 + $0x20] sm:$0xff]
    %v114 = vld [vmem:[%s3 + $0x28] sm:$0xff]
    %v115 = vld [vmem:[%s3 + $0x30] sm:$0xff]
    %v116 = vld [vmem:[%s3 + $0x38] sm:$0xff]
    %v117 = vld [vmem:[%s4] sm:$0x1]
    %v119 = vlaneseq
    %v120 = vshrl.u32 %v119, 7
    %v121 = vsub.s32 0, %v120
    %v122 = vrot.slane %v117, %v121
    %vm124 = vcmask 523264
    %v126 = vsel %vm124, %v108, 0
    %128 = vmatprep.subr.mxu0 0.0
    %129 = vmatpush1.msra.mxu0 0.0
    %130 = vmatprep.subr.mxu0 0.0
    %131 = vmatpush1.msra.mxu0 0.0
    %132 = vmatprep.subr.mxu0 0.0
    %133 = vmatpush1.msra.mxu0 0.0
    %134 = vmatprep.subr.mxu0 0.0
    %135 = vmatpush1.msra.mxu0 0.0
    %136 = vmatprep.subr.mxu0 0.0
    %137 = vmatpush1.msra.mxu0 0.0
    %138 = vmatprep.subr.mxu0 0.0
    %139 = vmatpush1.msra.mxu0 0.0
    %140 = vmatprep.subr.mxu0 0.0
    %141 = vmatpush1.msra.mxu0 0.0
    %142 = vmatprep.subr.mxu0 0.0
    %143 = vmatpush1.msra.mxu0 0.0
    %144 = vmatprep.subr.mxu0 0.0
    %145 = vmatpush1.msra.mxu0 %v116
    %146 = vmatprep.subr.mxu0 0.0
    %147 = vmatpush1.msra.mxu0 %v115
    %148 = vmatprep.subr.mxu0 0.0
    %149 = vmatpush1.msra.mxu0 %v114
    %150 = vmatprep.subr.mxu0 0.0
    %151 = vmatpush1.msra.mxu0 %v113
    %152 = vmatprep.subr.mxu0 0.0
    %153 = vmatpush1.msra.mxu0 %v112
    %154 = vmatprep.subr.mxu0 0.0
    %155 = vmatpush1.msra.mxu0 %v111
    %156 = vmatprep.subr.mxu0 0.0
    %157 = vmatpush1.msra.mxu0 %v110
    %158 = vmatprep.subr.mxu0 0.0
    %159 = vmatpush1.msra.mxu0 %v109
    %160 = vmatprep.subr.mxu0 0.0
    %161 = vmatpush2.msra.mxu0 0.0
    %162 = vmatprep.subr.mxu0 0.0
    %163 = vmatpush2.msra.mxu0 0.0
    %164 = vmatprep.subr.mxu0 0.0
    %165 = vmatpush2.msra.mxu0 0.0
    %166 = vmatprep.subr.mxu0 0.0
    %167 = vmatpush2.msra.mxu0 0.0
    %168 = vmatprep.subr.mxu0 0.0
    %169 = vmatpush2.msra.mxu0 0.0
    %170 = vmatprep.subr.mxu0 0.0
    %171 = vmatpush2.msra.mxu0 0.0
    %172 = vmatprep.subr.mxu0 0.0
    %173 = vmatpush2.msra.mxu0 0.0
    %174 = vmatprep.subr.mxu0 0.0
    %175 = vmatpush2.msra.mxu0 0.0
    %176 = vmatprep.subr.mxu0 0.0
    %177 = vmatpush2.msra.mxu0 0.0
    %178 = vmatprep.subr.mxu0 0.0
    %179 = vmatpush2.msra.mxu0 0.0
    %180 = vmatprep.subr.mxu0 0.0
    %181 = vmatpush2.msra.mxu0 0.0
    %182 = vmatprep.subr.mxu0 0.0
    %183 = vmatpush2.msra.mxu0 0.0
    %184 = vmatprep.subr.mxu0 0.0
    %185 = vmatpush2.msra.mxu0 0.0
    %186 = vmatprep.subr.mxu0 0.0
    %187 = vmatpush2.msra.mxu0 0.0
    %188 = vmatprep.subr.mxu0 0.0
    %189 = vmatpush2.msra.mxu0 0.0
    %190 = vmatprep.subr.mxu0 0.0
    %191 = vmatpush2.msra.mxu0 0.0
    %192 = vmatprep.mubr.f32.mxu0 0.0
    %193 = vmatmul.mubr.f32.gmra.mxu0 %v126
    %v194 = vpop.f32.mrf.mxu0
    %v195 = vadd.f32 %v122, %v194
    %v196 = vpop.f32.mrf.mxu0
    %197 = vdwg.mxu0
    %vm198 = vcmask 15360
    %199 = vst.msk [vmem:[#allocation2] sm:$0xff] %vm198, %v195
    // Predicated region
    $region22: #{network_forward.1} parent=1 // pred_check
      _
    $region23: #{network_forward.1} parent=1 // pred_check_branch
      %201 = sbr.rel (0) target = $region25
    $region24: #{network_forward.1} parent=1 // pred_region
      %s203 = ssub.s32 128, 32
      %204 = vsyncadd [#allocation3], %s203
      %s205 = sshll.u32 [#allocation2], 4
      %s206 = int_to_ptr.vmem [resolvable:$true] %s205
      %211 = dma.vmem_to_hbm [thread:$0]  %s206, 32, %s5, [#allocation3], 32, 32, 2
    $region25: #{network_forward.1} parent=1 // pred_fallthru
      _
    // Predicated region
    $region26: #{network_forward.1} parent=1 // pred_check
      _
    $region27: #{network_forward.1} parent=1 // pred_check_branch
      %213 = sbr.rel (0) target = $region29
    $region28: #{network_forward.1} parent=1 // pred_region
      %214 = dma.done [#allocation3], 128
    $region29: #{network_forward.1} parent=1 // pred_fallthru
      _
    %215 = vsyncpa [#allocation3], 1

</llo_original>
